<compile_context>
chip_gen: v7x
topology: tpu7x:2x2x1
jax: 0.10.0
libtpu: 0.0.40
codegen_flags: <defaults>
</compile_context>

<pallas_src>
import functools
import math

import numpy as np
import jax
import jax.numpy as jnp
from jax.experimental import pallas as pl
from jax.experimental.pallas import tpu as pltpu


def make_sinusoidal_pe(seq_len: int, d_model: int) -> jnp.ndarray:
    """Deterministic buffer construction, identical to the PyTorch __init__."""
    position = jnp.arange(0, seq_len, dtype=jnp.float32)[:, None]               # (S, 1)
    div_term = jnp.exp(
        jnp.arange(0, d_model, 2, dtype=jnp.float32) * (-math.log(10000.0) / d_model)
    )                                                                            # (ceil(D/2),)
    pe = jnp.zeros((seq_len, d_model), dtype=jnp.float32)
    pe = pe.at[:, 0::2].set(jnp.sin(position * div_term))
    if d_model % 2 == 0:
        pe = pe.at[:, 1::2].set(jnp.cos(position * div_term))
    else:
        pe = pe.at[:, 1::2].set(jnp.cos(position * div_term[:-1]))
    return pe


# ----------------------------- kernels -----------------------------

def _add_pe_kernel_3d(x_ref, pe_ref, o_ref):
    # x_ref/o_ref: (TS, B, D); pe_ref: (TS, D) -> broadcast over the batch axis
    # (exactly like .unsqueeze(1) in the PyTorch forward).
    o_ref[...] = x_ref[...].astype(o_ref.dtype) + pe_ref[...][:, None, :]


def _add_pe_kernel_flat(x_ref, pe_ref, o_ref, *, num_batch, d_model):
    # Lane-dense path: x_ref/o_ref are (TS, B*D), pe_ref is (TS, D).
    # Only taken when D % 128 == 0 and num_batch < 8, so every slice below is a
    # 128-aligned lane range -> unmasked vld/vst, and the unroll is tiny (< 8).
    pe = pe_ref[...]                       # hoisted: one PE load per grid step
    for b in range(num_batch):
        sl = slice(b * d_model, (b + 1) * d_model)
        o_ref[:, sl] = x_ref[:, sl].astype(o_ref.dtype) + pe


# ----------------------------- wrapper ------------------------------

_VMEM_LIMIT_BYTES = 32 * 1024 * 1024   # explicit scoped-VMEM limit; safe on v5e/v6e/v7x
_TILE_BYTE_BUDGET = 12 * 1024 * 1024   # target for the double-buffered working set


def _choose_block_rows(seq, bytes_per_row, block_rows):
    if block_rows is None:
        # Double-buffered footprint ~ 2 * block_rows * bytes_per_row <= budget.
        block_rows = max(8, _TILE_BYTE_BUDGET // (2 * bytes_per_row))
    return max(8, (min(block_rows, seq) // 8) * 8)   # multiple of 8, <= S


def sinusoidal_positional_embedding(x: jnp.ndarray, pe: jnp.ndarray,
                                    *, block_rows: int | None = None) -> jnp.ndarray:
    """x: (S, B, D); pe: (seq_len, D) with seq_len >= S. Returns x + pe[:S, None, :]."""
    S, B, D = x.shape
    L, Dp = pe.shape
    assert Dp == D and L >= S

    # Match torch type promotion (e.g. bf16 x + f32 pe -> f32), cast pe once here.
    out_dtype = jnp.promote_types(x.dtype, pe.dtype)
    pe = pe.astype(out_dtype)

    x_item = np.dtype(x.dtype).itemsize
    o_item = np.dtype(out_dtype).itemsize
    bytes_per_row = (x_item + o_item) * B * D + o_item * D

    if S >= 8 and L >= 8:
        ts = _choose_block_rows(S, bytes_per_row, block_rows)
        pe_in = pe                 # no host-side slice; index_map stays within first S rows
    else:
        ts = S                     # tiny-sequence fallback: full-extent blocks
        pe_in = pe[:S]

    grid = (pl.cdiv(S, ts),)
    cost = pl.CostEstimate(
        flops=int(S * B * D),
        transcendentals=0,
        bytes_accessed=int(S * B * D * (x_item + o_item) + S * D * o_item),
    )
    cparams = pltpu.CompilerParams(
        dimension_semantics=("parallel",),       # lets v7x shard the S-tiles over 2 TCs
        vmem_limit_bytes=_VMEM_LIMIT_BYTES,
    )
    pe_spec = pl.BlockSpec((ts, D), lambda i: (i, 0))

    # Lane-dense flattened view when the (B, D) trailing dims would waste the vreg.
    use_flat = (D % 128 == 0) and (B < 8)

    if use_flat:
        kern = functools.partial(_add_pe_kernel_flat, num_batch=B, d_model=D)
        out = pl.pallas_call(
            kern,
            out_shape=jax.ShapeDtypeStruct((S, B * D), out_dtype),
            grid_spec=pltpu.PrefetchScalarGridSpec(
                num_scalar_prefetch=0,
                grid=grid,
                in_specs=[pl.BlockSpec((ts, B * D), lambda i: (i, 0)), pe_spec],
                out_specs=pl.BlockSpec((ts, B * D), lambda i: (i, 0)),
            ),
            compiler_params=cparams,
            cost_estimate=cost,
        )(x.reshape(S, B * D), pe_in)            # reshape is a free contiguous view
        return out.reshape(S, B, D)

    return pl.pallas_call(
        _add_pe_kernel_3d,
        out_shape=jax.ShapeDtypeStruct((S, B, D), out_dtype),
        grid_spec=pltpu.PrefetchScalarGridSpec(
            num_scalar_prefetch=0,
            grid=grid,
            in_specs=[pl.BlockSpec((ts, B, D), lambda i: (i, 0, 0)), pe_spec],
            out_specs=pl.BlockSpec((ts, B, D), lambda i: (i, 0, 0)),
        ),
        compiler_params=cparams,
        cost_estimate=cost,
    )(x, pe_in)


if __name__ == "__main__":
    key = jax.random.PRNGKey(0)
    k1, k2, k3 = jax.random.split(key, 3)

    # Case 1: (S, B, D) = (8, 2, 32), f32 — broadcast (3-D) path, pe buffer longer than S.
    L1, D1, S1, B1 = 32, 32, 8, 2
    pe1 = make_sinusoidal_pe(L1, D1)
    x1 = jax.random.normal(k1, (S1, B1, D1), dtype=jnp.float32)
    out1 = jax.block_until_ready(sinusoidal_positional_embedding(x1, pe1))
    ref1 = x1 + pe1[:S1][:, None, :]
    assert out1.shape == x1.shape and out1.dtype == jnp.float32
    assert jnp.allclose(out1, ref1, atol=1e-6, rtol=1e-6), "case1 mismatch"

    # Case 2: D % 128 == 0, B < 8 — lane-dense flattened path, multi-step ragged grid.
    L2, D2, S2, B2 = 64, 128, 40, 2
    pe2 = make_sinusoidal_pe(L2, D2)
    x2 = jax.random.normal(k2, (S2, B2, D2), dtype=jnp.float32)
    out2 = jax.block_until_ready(sinusoidal_positional_embedding(x2, pe2, block_rows=16))
    ref2 = x2 + pe2[:S2][:, None, :]
    assert out2.shape == x2.shape
    assert jnp.allclose(out2, ref2, atol=1e-6, rtol=1e-6), "case2 mismatch"

    # Case 3: bf16 activations + f32 buffer -> f32 result (torch promotion semantics).
    x3 = jax.random.normal(k3, (S1, B1, D1), dtype=jnp.bfloat16)
    out3 = jax.block_until_ready(sinusoidal_positional_embedding(x3, pe1))
    ref3 = x3.astype(jnp.float32) + pe1[:S1][:, None, :]
    assert out3.dtype == jnp.float32
    assert jnp.allclose(out3, ref3, atol=1e-6, rtol=1e-6), "case3 mismatch"

    print("KERNEL_OK")
</pallas_src>

<mosaic_0001>
module attributes {stable_mosaic.version = 11 : i64} {
  func.func @_add_pe_kernel_3d(%arg0: i32, %arg1: memref<8x2x32xf32, #tpu.memory_space<vmem>>, %arg2: memref<8x32xf32, #tpu.memory_space<vmem>>, %arg3: memref<8x2x32xf32, #tpu.memory_space<vmem>>) attributes {dimension_semantics = [#tpu.dimension_semantics<parallel>], iteration_bounds = array<i64: 1>, scalar_prefetch = 0 : i64, scratch_operands = 0 : i64, tpu.core_type = #tpu.core_type<tc>, window_params = [{transform_indices = @transform_0, window_bounds = array<i64: 8, 2, 32>}, {transform_indices = @transform_1, window_bounds = array<i64: 8, 32>}, {transform_indices = @transform_2, window_bounds = array<i64: 8, 2, 32>}]} {
    %c0 = arith.constant 0 : index
    %c0_0 = arith.constant 0 : index
    %c0_1 = arith.constant 0 : index
    %0 = vector.load %arg1[%c0, %c0_0, %c0_1] : memref<8x2x32xf32, #tpu.memory_space<vmem>>, vector<8x2x32xf32>
    %c0_2 = arith.constant 0 : index
    %c0_3 = arith.constant 0 : index
    %1 = vector.load %arg2[%c0_2, %c0_3] : memref<8x32xf32, #tpu.memory_space<vmem>>, vector<8x32xf32>
    %2 = vector.shape_cast %1 : vector<8x32xf32> to vector<8x1x32xf32>
    %3 = vector.broadcast %2 : vector<8x1x32xf32> to vector<8x2x32xf32>
    %4 = arith.addf %0, %3 : vector<8x2x32xf32>
    %c0_4 = arith.constant 0 : index
    %c0_5 = arith.constant 0 : index
    %c0_6 = arith.constant 0 : index
    %5 = vector.load %arg3[%c0_4, %c0_5, %c0_6] : memref<8x2x32xf32, #tpu.memory_space<vmem>>, vector<8x2x32xf32>
    tpu.vector_store %arg3[%c0_4, %c0_5, %c0_6], %4 {strides = array<i32>} : memref<8x2x32xf32, #tpu.memory_space<vmem>>, vector<8x2x32xf32>,
    return
  }
  func.func @transform_0(%arg0: i32) -> (i32, i32, i32) {
    %c0_i32 = arith.constant 0 : i32
    %c0_i32_0 = arith.constant 0 : i32
    %c0_i32_1 = arith.constant 0 : i32
    return %arg0, %c0_i32, %c0_i32_0 : i32, i32, i32
  }
  func.func @transform_1(%arg0: i32) -> (i32, i32) {
    %c0_i32 = arith.constant 0 : i32
    %c0_i32_0 = arith.constant 0 : i32
    return %arg0, %c0_i32 : i32, i32
  }
  func.func @transform_2(%arg0: i32) -> (i32, i32, i32) {
    %c0_i32 = arith.constant 0 : i32
    %c0_i32_0 = arith.constant 0 : i32
    %c0_i32_1 = arith.constant 0 : i32
    return %arg0, %c0_i32, %c0_i32_0 : i32, i32, i32
  }
}

</mosaic_0001>

<llo_original>
// kernel: tpu_custom_call.1
$region0: #{tpu_custom_call.1}
  #allocation0 [shape = 'u32[]', space=smem, size = 0x4, offset = 0x4, fixed_abs, tag = 'smem constant byte address 0x4 - core index']
  #allocation1 [shape = 'u32[144,128]{1,0:T(1,128)}', space=vmem, size = 0x12000, scoped, tag = 'internal scratch']
  %s0 = inlined_call_operand.hbm [shape: f32[8,2,32], index: 0, kind: input, shape index: {}]
  %s1 = inlined_call_operand.hbm [shape: f32[32,32], index: 1, kind: input, shape index: {}]
  %s2 = inlined_call_operand.hbm [shape: f32[8,2,32], index: 2, kind: output, shape index: {}]
  %s3 = sld [smem:[#allocation0]]
  $region26: #{tpu_custom_call.1} parent=0
    _
  %s5 = ssub.s32 1, %s3
  %s6 = scalar_select 0, %s5, %s3
  $region1: #{tpu_custom_call.1} parent=0
    #allocation2 [shape = 'u8[8192]{0}', space=vmem, size = 0x2000, scoped, tag = 'input window, operand 0, single buffered']
    #allocation3 [shape = 's32[1]{0}', space=sflag, size = 0x4, scoped, tag = 'scoped memory for tpu_custom_call.1']
    #allocation4 [shape = 's32[1]{0}', space=sflag, size = 0x4, scoped, tag = 'scoped memory for tpu_custom_call.1']
    #allocation5 [shape = 'u8[4096]{0}', space=vmem, size = 0x1000, scoped, tag = 'input window, operand 1, single buffered']
    #allocation6 [shape = 's32[1]{0}', space=sflag, size = 0x4, scoped, tag = 'scoped memory for tpu_custom_call.1']
    #allocation7 [shape = 'u8[8192]{0}', space=vmem, size = 0x2000, scoped, tag = 'output window, operand 0, single buffered']
    %7 = vsyncpa [#allocation3], 0
    %8 = vsyncpa [#allocation6], 0
    %9 = vsyncpa [#allocation4], 0
    // Predicated region
    $region2: #{tpu_custom_call.1} parent=1 // pred_check
      _
    $region3: #{tpu_custom_call.1} parent=1 // pred_check_branch
      %11 = sbr.rel (0) target = $region5
    $region4: #{tpu_custom_call.1} parent=1 // pred_region
      %s13 = ssub.s32 256, 256
      %14 = vsyncadd [#allocation3], %s13
      %s15 = sshll.u32 [#allocation2], 4
      %s16 = int_to_ptr.vmem [resolvable:$true] %s15
      %21 = dma.hbm_to_vmem [thread:$0]  %s0, 256, %s16, [#allocation3], 32, 32, 2
    $region5: #{tpu_custom_call.1} parent=1 // pred_fallthru
      _
    // Predicated region
    $region6: #{tpu_custom_call.1} parent=1 // pred_check
      _
    $region7: #{tpu_custom_call.1} parent=1 // pred_check_branch
      %23 = sbr.rel (0) target = $region9
    $region8: #{tpu_custom_call.1} parent=1 // pred_region
      %s25 = ssub.s32 128, 128
      %26 = vsyncadd [#allocation6], %s25
      %s28 = sshll.u32 [#allocation5], 4
      %s29 = int_to_ptr.vmem [resolvable:$true] %s28
      %31 = dma.hbm_to_vmem [thread:$0]  %s1, 128, %s29, [#allocation6]
    $region9: #{tpu_custom_call.1} parent=1 // pred_fallthru
      _
    // Predicated region
    $region10: #{tpu_custom_call.1} parent=1 // pred_check
      _
    $region11: #{tpu_custom_call.1} parent=1 // pred_check_branch
      %33 = sbr.rel (0) target = $region13
    $region12: #{tpu_custom_call.1} parent=1 // pred_region
      %34 = dma.done [#allocation3], 256
    $region13: #{tpu_custom_call.1} parent=1 // pred_fallthru
      _
    // Predicated region
    $region14: #{tpu_custom_call.1} parent=1 // pred_check
      _
    $region15: #{tpu_custom_call.1} parent=1 // pred_check_branch
      %36 = sbr.rel (0) target = $region17
    $region16: #{tpu_custom_call.1} parent=1 // pred_region
      %37 = dma.done [#allocation6], 128
    $region17: #{tpu_custom_call.1} parent=1 // pred_fallthru
      _
    %v38 = vld [vmem:[#allocation2] sm:$0x3]
    %v39 = vld [vmem:[#allocation2 + $0x2] sm:$0x3]
    %v40 = vld [vmem:[#allocation2 + $0x4] sm:$0x3]
    %v41 = vld [vmem:[#allocation2 + $0x6] sm:$0x3]
    %v42 = vld [vmem:[#allocation2 + $0x8] sm:$0x3]
    %v43 = vld [vmem:[#allocation2 + $0xa] sm:$0x3]
    %v44 = vld [vmem:[#allocation2 + $0xc] sm:$0x3]
    %v45 = vld [vmem:[#allocation2 + $0xe] sm:$0x3]
    %v46 = vld [vmem:[#allocation5] sm:$0xff]
    %v48 = vcombine.high %v46, %v46
    %v50 = vunpack.c.l.s4 1966171168
    %v51 = vunpack.c.0.s8 %v50
    %v52 = vlaneseq
    %v53 = vshrl.u32 %v52, 7
    %v54 = vsub.s32 %v51, %v53
    %v55 = vrot.slane %v46, %v54
    %v57 = vunpack.c.l.s4 1966171168
    %v58 = vunpack.c.0.s8 %v57
    %v59 = vlaneseq
    %v60 = vshrl.u32 %v59, 7
    %v61 = vsub.s32 %v58, %v60
    %v62 = vrot.slane %v48, %v61
    %v63 = vcombine.high %v55, %v55
    %v64 = vcombine.high %v62, %v62
    %v66 = vunpack.c.l.s4 1966171168
    %v67 = vunpack.c.0.s8 %v66
    %v68 = vlaneseq
    %v69 = vshrl.u32 %v68, 7
    %v70 = vsub.s32 %v67, %v69
    %v71 = vrot.slane %v55, %v70
    %v73 = vunpack.c.l.s4 1966171168
    %v74 = vunpack.c.0.s8 %v73
    %v75 = vlaneseq
    %v76 = vshrl.u32 %v75, 7
    %v77 = vsub.s32 %v74, %v76
    %v78 = vrot.slane %v62, %v77
    %v80 = vunpack.c.l.s4 1966171168
    %v81 = vunpack.c.0.s8 %v80
    %v82 = vlaneseq
    %v83 = vshrl.u32 %v82, 7
    %v84 = vsub.s32 %v81, %v83
    %v85 = vrot.slane %v63, %v84
    %v87 = vunpack.c.l.s4 1966171168
    %v88 = vunpack.c.0.s8 %v87
    %v89 = vlaneseq
    %v90 = vshrl.u32 %v89, 7
    %v91 = vsub.s32 %v88, %v90
    %v92 = vrot.slane %v64, %v91
    %v93 = vcombine.high %v71, %v71
    %v94 = vcombine.high %v78, %v78
    %v95 = vcombine.high %v85, %v85
    %v96 = vcombine.high %v92, %v92
    %v97 = vlaneseq
    %v98 = vshrl.u32 %v97, 7
    %v99 = vsub.s32 0, %v98
    %v100 = vrot.slane %v71, %v99
    %v101 = vlaneseq
    %v102 = vshrl.u32 %v101, 7
    %v103 = vsub.s32 0, %v102
    %v104 = vrot.slane %v85, %v103
    %v105 = vlaneseq
    %v106 = vshrl.u32 %v105, 7
    %v107 = vsub.s32 0, %v106
    %v108 = vrot.slane %v93, %v107
    %v109 = vlaneseq
    %v110 = vshrl.u32 %v109, 7
    %v111 = vsub.s32 0, %v110
    %v112 = vrot.slane %v95, %v111
    %v113 = vlaneseq
    %v114 = vshrl.u32 %v113, 7
    %v115 = vsub.s32 0, %v114
    %v116 = vrot.slane %v78, %v115
    %v117 = vlaneseq
    %v118 = vshrl.u32 %v117, 7
    %v119 = vsub.s32 0, %v118
    %v120 = vrot.slane %v92, %v119
    %v121 = vlaneseq
    %v122 = vshrl.u32 %v121, 7
    %v123 = vsub.s32 0, %v122
    %v124 = vrot.slane %v94, %v123
    %v125 = vlaneseq
    %v126 = vshrl.u32 %v125, 7
    %v127 = vsub.s32 0, %v126
    %v128 = vrot.slane %v96, %v127
    %v137 = vadd.f32 %v38, %v100
    %v138 = vadd.f32 %v39, %v104
    %v139 = vadd.f32 %v40, %v108
    %v140 = vadd.f32 %v41, %v112
    %v141 = vadd.f32 %v42, %v116
    %v142 = vadd.f32 %v43, %v120
    %v143 = vadd.f32 %v44, %v124
    %v144 = vadd.f32 %v45, %v128
    %vm145 = vcmask 254976
    %146 = vst.msk [vmem:[#allocation7] sm:$0x3] %vm145, %v137
    %147 = vst.msk [vmem:[#allocation7 + $0x2] sm:$0x3] %vm145, %v138
    %148 = vst.msk [vmem:[#allocation7 + $0x4] sm:$0x3] %vm145, %v139
    %149 = vst.msk [vmem:[#allocation7 + $0x6] sm:$0x3] %vm145, %v140
    %150 = vst.msk [vmem:[#allocation7 + $0x8] sm:$0x3] %vm145, %v141
    %151 = vst.msk [vmem:[#allocation7 + $0xa] sm:$0x3] %vm145, %v142
    %152 = vst.msk [vmem:[#allocation7 + $0xc] sm:$0x3] %vm145, %v143
    %153 = vst.msk [vmem:[#allocation7 + $0xe] sm:$0x3] %vm145, %v144
    // Predicated region
    $region18: #{tpu_custom_call.1} parent=1 // pred_check
      _
    $region19: #{tpu_custom_call.1} parent=1 // pred_check_branch
      %155 = sbr.rel (0) target = $region21
    $region20: #{tpu_custom_call.1} parent=1 // pred_region
      %s157 = ssub.s32 256, 256
      %158 = vsyncadd [#allocation4], %s157
      %s159 = sshll.u32 [#allocation7], 4
      %s160 = int_to_ptr.vmem [resolvable:$true] %s159
      %165 = dma.vmem_to_hbm [thread:$0]  %s160, 256, %s2, [#allocation4], 32, 32, 2
    $region21: #{tpu_custom_call.1} parent=1 // pred_fallthru
      _
    // Predicated region
    $region22: #{tpu_custom_call.1} parent=1 // pred_check
      _
    $region23: #{tpu_custom_call.1} parent=1 // pred_check_branch
      %167 = sbr.rel (0) target = $region25
    $region24: #{tpu_custom_call.1} parent=1 // pred_region
      %168 = dma.done [#allocation4], 256
    $region25: #{tpu_custom_call.1} parent=1 // pred_fallthru
      _
    %169 = vsyncpa [#allocation3], 1
    %170 = vsyncpa [#allocation6], 1
    %171 = vsyncpa [#allocation4], 1

</llo_original>
